<compile_context>
chip_gen: v7x
topology: tpu7x:2x2x1
jax: 0.10.0
libtpu: 0.0.40
codegen_flags: <defaults>
</compile_context>

<pallas_src>
import jax
import jax.numpy as jnp
from jax.experimental import pallas as pl
from jax.experimental.pallas import tpu as pltpu

# ITU-R 601-2 luma coefficients used by torchvision.transforms.Grayscale
_LUMA_R = 0.2989
_LUMA_G = 0.587
_LUMA_B = 0.114

_LANES = 128
_TARGET_BLOCK_BYTES = 1 << 20   # ~1 MiB per channel block per grid step
_MIN_SPATIAL_TILES = 8          # give both v7x TCs work + enable pipelining


def _round_up(x, m):
    return -(-x // m) * m


def _spatial_layout(hw, itemsize, target_block_bytes=_TARGET_BLOCK_BYTES):
    """Map flattened H*W onto a (rows_pad, 128) lane/sublane-dense layout.

    Returns (rows_pad, tile_rows, n_tiles) with:
      * rows_pad   : H*W padded only to the 8x128 boundary (minimal padding)
      * tile_rows  : multiple of 8, sized so one channel block is ~1 MiB,
                     but split into >= _MIN_SPATIAL_TILES tiles when possible
      * n_tiles    : cdiv(rows_pad, tile_rows) -- last block may be partial.
    """
    rows = pl.cdiv(hw, _LANES)
    rows_pad = max(_round_up(rows, 8), 8)
    # Byte-sized cap on the per-channel block (scales with dtype width).
    max_tile_rows = max(_round_up(target_block_bytes // (_LANES * itemsize), 8), 8)
    # Prefer at least _MIN_SPATIAL_TILES grid steps for megacore / overlap.
    tile_for_split = _round_up(pl.cdiv(rows_pad, _MIN_SPATIAL_TILES), 8)
    tile_rows = min(max_tile_rows, max(tile_for_split, 8))
    tile_rows = min(tile_rows, rows_pad)
    n_tiles = pl.cdiv(rows_pad, tile_rows)
    return rows_pad, tile_rows, n_tiles


def _to_rows(x_nc_hw, rows_pad):
    """(N, C, HW) -> (N, C, rows_pad, 128); pads only the small 8x128 tail."""
    n, c, hw = x_nc_hw.shape
    hw_pad = rows_pad * _LANES
    if hw_pad != hw:
        x_nc_hw = jnp.pad(x_nc_hw, ((0, 0), (0, 0), (0, hw_pad - hw)))
    return x_nc_hw.reshape(n, c, rows_pad, _LANES)


# ---------------------------------------------------------------------------
# Kernels
# ---------------------------------------------------------------------------

def _grayscale_kernel(x_ref, o_ref):
    # x_ref: (3, TILE_R, 128) — one strided DMA per step; channels sliced here.
    r = x_ref[0]
    g = x_ref[1]
    b = x_ref[2]
    if r.dtype != jnp.float32:
        r = r.astype(jnp.float32)
        g = g.astype(jnp.float32)
        b = b.astype(jnp.float32)
    y = _LUMA_R * r + _LUMA_G * g + _LUMA_B * b
    o_ref[...] = y.astype(o_ref.dtype)


def _rgb_kernel(x_ref, o_ref):
    # x_ref: (TILE_R, 128)   o_ref: (3, TILE_R, 128)
    x = x_ref[...]
    o_ref[0] = x          # three stores reuse the same loaded vregs;
    o_ref[1] = x          # no (3, TILE_R, 128) broadcast intermediate.
    o_ref[2] = x


# ---------------------------------------------------------------------------
# Wrappers
# ---------------------------------------------------------------------------

def grayscale_transform(x, *, target_block_bytes=_TARGET_BLOCK_BYTES):
    """x: (N, 3, H, W) -> (N, 1, H, W)"""
    n, c, h, w = x.shape
    assert c == 3, "Grayscale path expects 3-channel input"
    hw = h * w
    itemsize = jnp.dtype(x.dtype).itemsize
    rows_pad, tile_rows, n_tiles = _spatial_layout(hw, itemsize, target_block_bytes)
    hw_pad = rows_pad * _LANES
    x4 = _to_rows(x.reshape(n, c, hw), rows_pad)        # (N, 3, rows_pad, 128)

    out = pl.pallas_call(
        _grayscale_kernel,
        out_shape=jax.ShapeDtypeStruct((n, rows_pad, _LANES), x.dtype),
        grid=(n, n_tiles),
        in_specs=[pl.BlockSpec((None, 3, tile_rows, _LANES),
                               lambda n_i, t_i: (n_i, 0, t_i, 0))],
        out_specs=pl.BlockSpec((None, tile_rows, _LANES),
                               lambda n_i, t_i: (n_i, t_i, 0)),
        compiler_params=pltpu.CompilerParams(
            dimension_semantics=("parallel", "parallel")),
        cost_estimate=pl.CostEstimate(
            flops=5 * n * rows_pad * _LANES,
            transcendentals=0,
            bytes_accessed=(3 + 1) * n * rows_pad * _LANES * itemsize),
    )(x4)

    y = out.reshape(n, hw_pad)
    if hw_pad != hw:
        y = y[:, :hw]
    return y.reshape(n, 1, h, w)


def rgb_transform(x, *, target_block_bytes=_TARGET_BLOCK_BYTES):
    """x: (N, 1, H, W) -> (N, 3, H, W)  (channel replication, PIL convert('RGB'))"""
    n, c, h, w = x.shape
    assert c == 1, "RGB path expects 1-channel input"
    hw = h * w
    itemsize = jnp.dtype(x.dtype).itemsize
    rows_pad, tile_rows, n_tiles = _spatial_layout(hw, itemsize, target_block_bytes)
    hw_pad = rows_pad * _LANES
    x4 = _to_rows(x.reshape(n, c, hw), rows_pad)        # (N, 1, rows_pad, 128)

    out = pl.pallas_call(
        _rgb_kernel,
        out_shape=jax.ShapeDtypeStruct((n, 3, rows_pad, _LANES), x.dtype),
        grid=(n, n_tiles),
        in_specs=[pl.BlockSpec((None, None, tile_rows, _LANES),
                               lambda n_i, t_i: (n_i, 0, t_i, 0))],
        out_specs=pl.BlockSpec((None, 3, tile_rows, _LANES),
                               lambda n_i, t_i: (n_i, 0, t_i, 0)),
        compiler_params=pltpu.CompilerParams(
            dimension_semantics=("parallel", "parallel")),
        cost_estimate=pl.CostEstimate(
            flops=0,
            transcendentals=0,
            bytes_accessed=(1 + 3) * n * rows_pad * _LANES * itemsize),
    )(x4)

    y = out.reshape(n, 3, hw_pad)
    if hw_pad != hw:
        y = y[:, :, :hw]
    return y.reshape(n, 3, h, w)


def channel_transform(x, rgb=False):
    """Pallas equivalent of ChannelTransform.forward."""
    if not rgb:
        return grayscale_transform(x)
    else:
        return rgb_transform(x)


if __name__ == "__main__":
    key = jax.random.PRNGKey(0)
    k1, k2, k3, k4, k5 = jax.random.split(key, 5)

    # Grayscale path: (2, 3, 16, 16) RGB image -> (2, 1, 16, 16)
    x_rgb = jax.random.uniform(k1, (2, 3, 16, 16), dtype=jnp.float32)
    y_gray = channel_transform(x_rgb, rgb=False)
    jax.block_until_ready(y_gray)
    ref_gray = (_LUMA_R * x_rgb[:, 0:1] + _LUMA_G * x_rgb[:, 1:2]
                + _LUMA_B * x_rgb[:, 2:3])
    assert y_gray.shape == (2, 1, 16, 16)
    assert jnp.allclose(y_gray, ref_gray, atol=1e-5), "grayscale mismatch"

    # Non-128-aligned spatial shape exercises the minimal pad/crop path.
    x_odd = jax.random.uniform(k3, (2, 3, 17, 19), dtype=jnp.float32)
    y_odd = channel_transform(x_odd, rgb=False)
    jax.block_until_ready(y_odd)
    ref_odd = (_LUMA_R * x_odd[:, 0:1] + _LUMA_G * x_odd[:, 1:2]
               + _LUMA_B * x_odd[:, 2:3])
    assert y_odd.shape == (2, 1, 17, 19)
    assert jnp.allclose(y_odd, ref_odd, atol=1e-5), "grayscale (padded) mismatch"

    # 96x96: aligned (no pad/crop), multi-tile grid with a partial last block.
    x_mid = jax.random.uniform(k4, (1, 3, 96, 96), dtype=jnp.float32)
    y_mid = channel_transform(x_mid, rgb=False)
    jax.block_until_ready(y_mid)
    ref_mid = (_LUMA_R * x_mid[:, 0:1] + _LUMA_G * x_mid[:, 1:2]
               + _LUMA_B * x_mid[:, 2:3])
    assert y_mid.shape == (1, 1, 96, 96)
    assert jnp.allclose(y_mid, ref_mid, atol=1e-5), "grayscale (multi-tile) mismatch"

    # RGB path: (2, 1, 16, 16) grayscale image -> (2, 3, 16, 16)
    x_gray = jax.random.uniform(k2, (2, 1, 16, 16), dtype=jnp.float32)
    y_rgb = channel_transform(x_gray, rgb=True)
    jax.block_until_ready(y_rgb)
    ref_rgb = jnp.broadcast_to(x_gray, (2, 3, 16, 16))
    assert y_rgb.shape == (2, 3, 16, 16)
    assert jnp.allclose(y_rgb, ref_rgb), "rgb mismatch"

    # RGB path, multi-tile + partial last block.
    x_gray_mid = jax.random.uniform(k5, (1, 1, 96, 96), dtype=jnp.float32)
    y_rgb_mid = channel_transform(x_gray_mid, rgb=True)
    jax.block_until_ready(y_rgb_mid)
    ref_rgb_mid = jnp.broadcast_to(x_gray_mid, (1, 3, 96, 96))
    assert y_rgb_mid.shape == (1, 3, 96, 96)
    assert jnp.allclose(y_rgb_mid, ref_rgb_mid), "rgb (multi-tile) mismatch"

    print("KERNEL_OK")
</pallas_src>

<mosaic_0001>
module attributes {stable_mosaic.version = 11 : i64} {
  func.func @_grayscale_kernel(%arg0: i32, %arg1: i32, %arg2: memref<1x3x8x128xf32, #tpu.memory_space<vmem>>, %arg3: memref<1x8x128xf32, #tpu.memory_space<vmem>>) attributes {dimension_semantics = [#tpu.dimension_semantics<parallel>, #tpu.dimension_semantics<parallel>], iteration_bounds = array<i64: 2, 1>, scalar_prefetch = 0 : i64, scratch_operands = 0 : i64, tpu.core_type = #tpu.core_type<tc>, window_params = [{transform_indices = @transform_0, window_bounds = array<i64: 1, 3, 8, 128>}, {transform_indices = @transform_1, window_bounds = array<i64: 1, 8, 128>}]} {
    %c0 = arith.constant 0 : index
    %c0_0 = arith.constant 0 : index
    %c0_1 = arith.constant 0 : index
    %c0_2 = arith.constant 0 : index
    %0 = vector.load %arg2[%c0, %c0_0, %c0_1, %c0_2] : memref<1x3x8x128xf32, #tpu.memory_space<vmem>>, vector<1x1x8x128xf32>
    %1 = vector.shape_cast %0 : vector<1x1x8x128xf32> to vector<8x128xf32>
    %c0_3 = arith.constant 0 : index
    %c1 = arith.constant 1 : index
    %c0_4 = arith.constant 0 : index
    %c0_5 = arith.constant 0 : index
    %2 = vector.load %arg2[%c0_3, %c1, %c0_4, %c0_5] : memref<1x3x8x128xf32, #tpu.memory_space<vmem>>, vector<1x1x8x128xf32>
    %3 = vector.shape_cast %2 : vector<1x1x8x128xf32> to vector<8x128xf32>
    %c0_6 = arith.constant 0 : index
    %c2 = arith.constant 2 : index
    %c0_7 = arith.constant 0 : index
    %c0_8 = arith.constant 0 : index
    %4 = vector.load %arg2[%c0_6, %c2, %c0_7, %c0_8] : memref<1x3x8x128xf32, #tpu.memory_space<vmem>>, vector<1x1x8x128xf32>
    %5 = vector.shape_cast %4 : vector<1x1x8x128xf32> to vector<8x128xf32>
    %cst = arith.constant 2.989000e-01 : f32
    %6 = vector.broadcast %cst : f32 to vector<8x128xf32>
    %7 = arith.mulf %6, %1 : vector<8x128xf32>
    %cst_9 = arith.constant 5.870000e-01 : f32
    %8 = vector.broadcast %cst_9 : f32 to vector<8x128xf32>
    %9 = arith.mulf %8, %3 : vector<8x128xf32>
    %10 = arith.addf %7, %9 : vector<8x128xf32>
    %cst_10 = arith.constant 1.140000e-01 : f32
    %11 = vector.broadcast %cst_10 : f32 to vector<8x128xf32>
    %12 = arith.mulf %11, %5 : vector<8x128xf32>
    %13 = arith.addf %10, %12 : vector<8x128xf32>
    %c0_11 = arith.constant 0 : index
    %c0_12 = arith.constant 0 : index
    %c0_13 = arith.constant 0 : index
    %14 = vector.load %arg3[%c0_11, %c0_12, %c0_13] : memref<1x8x128xf32, #tpu.memory_space<vmem>>, vector<1x8x128xf32>
    %15 = vector.shape_cast %14 : vector<1x8x128xf32> to vector<8x128xf32>
    %16 = vector.shape_cast %13 : vector<8x128xf32> to vector<1x8x128xf32>
    tpu.vector_store %arg3[%c0_11, %c0_12, %c0_13], %16 {strides = array<i32>} : memref<1x8x128xf32, #tpu.memory_space<vmem>>, vector<1x8x128xf32>,
    return
  }
  func.func @transform_0(%arg0: i32, %arg1: i32) -> (i32, i32, i32, i32) {
    %c0_i32 = arith.constant 0 : i32
    %c0_i32_0 = arith.constant 0 : i32
    %c0_i32_1 = arith.constant 0 : i32
    return %arg0, %c0_i32, %arg1, %c0_i32_0 : i32, i32, i32, i32
  }
  func.func @transform_1(%arg0: i32, %arg1: i32) -> (i32, i32, i32) {
    %c0_i32 = arith.constant 0 : i32
    %c0_i32_0 = arith.constant 0 : i32
    return %arg0, %arg1, %c0_i32 : i32, i32, i32
  }
}

</mosaic_0001>

<llo_original>
// kernel: tpu_custom_call.1
$region0: #{tpu_custom_call.1}
  #allocation0 [shape = 'u32[]', space=smem, size = 0x4, offset = 0x4, fixed_abs, tag = 'smem constant byte address 0x4 - core index']
  #allocation1 [shape = 'u32[144,128]{1,0:T(1,128)}', space=vmem, size = 0x12000, scoped, tag = 'internal scratch']
  %s0 = inlined_call_operand.hbm [shape: f32[2,3,8,128], index: 0, kind: input, shape index: {}]
  %s1 = inlined_call_operand.hbm [shape: f32[2,8,128], index: 1, kind: output, shape index: {}]
  %s2 = sld [smem:[#allocation0]]
  $region41: #{tpu_custom_call.1} parent=0
    _
  %s4 = ssub.s32 1, %s2
  %s5 = scalar_select 0, %s4, %s2
  $region1: #{tpu_custom_call.1} parent=0
    #allocation2 [shape = 'u8[24576]{0}', space=vmem, size = 0x6000, scoped, tag = 'input window, operand 0']
    #allocation3 [shape = 's32[2]{0}', space=sflag, size = 0x8, scoped, tag = 'scoped memory for tpu_custom_call.1']
    #allocation4 [shape = 's32[2]{0}', space=sflag, size = 0x8, scoped, tag = 'scoped memory for tpu_custom_call.1']
    #allocation5 [shape = 'u8[8192]{0}', space=vmem, size = 0x2000, scoped, tag = 'output window, operand 0']
    %6 = vsyncpa [#allocation3], 0
    %s7 = scalar_lea.sflag [#allocation3], 1
    %8 = vsyncpa %s7, 0
    %9 = vsyncpa [#allocation4], 0
    %s10 = scalar_lea.sflag [#allocation4], 1
    %11 = vsyncpa %s10, 0
    loop: start=0, step=1, limit=4
    $region2: #{tpu_custom_call.1} parent=1 // loop_pre_header
      _
    $region3: #{tpu_custom_call.1} parent=1 // loop_header
      %s13 = sphi 0, %s17
      %p14 = scmp.ge.s32.totalorder %s13, 4
      %s20 = sphi 0, %s32
      %s21 = sphi 0, %s28
      %s22 = sphi 0, %s20
      %s23 = sphi 0, %s21
      %s24 = sphi 0, %s22
      %s25 = sphi 0, %s23
      %s37 = sphi 0, %s39
      %s40 = sphi 0, %s37
      %s41 = sphi 0, %s40
      %s57 = sphi 0, %s41
      %s65 = sphi 0, %s67
      %s68 = sphi 0, %s65
      %s69 = sphi 0, %s68
      %s85 = sphi 0, %s69
    $region4: #{tpu_custom_call.1} parent=1 // loop_header_branch
      %16 = sbr.rel (%p14) target = $region8
    $region5: #{tpu_custom_call.1} parent=1 // loop_body
      %s18 = ssub.s32 %s13, 1
      %s19 = ssub.s32 %s13, 2
      %s26 = sadd.s32 1, %s21
      %p27 = scmp.ge.s32.totalorder %s26, 1
      %s28 = scalar_select %p27, 0, %s26
      %s29 = sadd.s32 1, %s20
      %s30 = scalar_select %p27, %s29, %s20
      %p31 = scmp.ge.s32.totalorder %s30, 2
      %s32 = scalar_select %p31, 0, %s30
      %s33 = ssub.s32 %s20, %s32
      %s34 = ssub.s32 %s21, %s28
      %s35 = sor.u32 %s33, %s34
      %p36 = scmp.eq.s32.totalorder %s35, 0
      %s38 = sadd.s32 %s37, 1
      %s39 = scalar_select %p36, %s37, %s38
      %p42 = pneg %p36
      %p43 = scmp.eq.s32.totalorder %s13, 1
      %p44 = por %p42, %p43
      %p45 = scmp.ne.s32.totalorder %s37, %s40
      %p46 = scmp.eq.s32.totalorder %s13, 0
      %p47 = por %p45, %p46
      %p48 = scmp.ne.s32.totalorder %s37, %s40
      %p49 = scmp.eq.s32.totalorder %s18, 1
      %p50 = por %p48, %p49
      %p51 = scmp.ne.s32.totalorder %s40, %s41
      %p52 = scmp.eq.s32.totalorder %s18, 0
      %p53 = por %p51, %p52
      %p54 = scmp.ne.s32.totalorder %s40, %s41
      %p55 = scmp.eq.s32.totalorder %s19, 1
      %p56 = por %p54, %p55
      %p58 = scmp.ne.s32.totalorder %s41, %s57
      %p59 = scmp.eq.s32.totalorder %s19, 0
      %p60 = por %p58, %p59
      %s61 = ssub.s32 %s20, %s32
      %s62 = ssub.s32 %s21, %s28
      %s63 = sor.u32 %s61, %s62
      %p64 = scmp.eq.s32.totalorder %s63, 0
      %s66 = sadd.s32 %s65, 1
      %s67 = scalar_select %p64, %s65, %s66
      %p70 = pneg %p64
      %p71 = scmp.eq.s32.totalorder %s13, 1
      %p72 = por %p70, %p71
      %p73 = scmp.ne.s32.totalorder %s65, %s68
      %p74 = scmp.eq.s32.totalorder %s13, 0
      %p75 = por %p73, %p74
      %p76 = scmp.ne.s32.totalorder %s65, %s68
      %p77 = scmp.eq.s32.totalorder %s18, 1
      %p78 = por %p76, %p77
      %p79 = scmp.ne.s32.totalorder %s68, %s69
      %p80 = scmp.eq.s32.totalorder %s18, 0
      %p81 = por %p79, %p80
      %p82 = scmp.ne.s32.totalorder %s68, %s69
      %p83 = scmp.eq.s32.totalorder %s19, 1
      %p84 = por %p82, %p83
      %p86 = scmp.ne.s32.totalorder %s69, %s85
      %p87 = scmp.eq.s32.totalorder %s19, 0
      %p88 = por %p86, %p87
      %p89 = scmp.le.s32.totalorder 1, %s13
      %p90 = scmp.lt.s32.totalorder %s13, 3
      %p91 = pnand %p89, %p90
      %p92 = pneg %p91
      // Predicated region
      $region9: #{tpu_custom_call.1} parent=5 // pred_check
        _
      $region10: #{tpu_custom_call.1} parent=5 // pred_check_branch
        %94 = sbr.rel (%p91) target = $region12
      $region11: #{tpu_custom_call.1} parent=5 // pred_region
        %s95 = ssub.s32 %s13, 1
      $region12: #{tpu_custom_call.1} parent=5 // pred_fallthru
        _
      %p96 = scmp.lt.s32.totalorder %s13, 2
      // Predicated region
      $region13: #{tpu_custom_call.1} parent=5 // pred_check
        %p97 = pneg %p96
      $region14: #{tpu_custom_call.1} parent=5 // pred_check_branch
        %99 = sbr.rel (%p97) target = $region16
      $region15: #{tpu_custom_call.1} parent=5 // pred_region
        // Predicated region
        $region17: #{tpu_custom_call.1} parent=15 // pred_check
          %p100 = pneg %p47
        $region18: #{tpu_custom_call.1} parent=15 // pred_check_branch
          %102 = sbr.rel (%p100) target = $region20
        $region19: #{tpu_custom_call.1} parent=15 // pred_region
          %s103 = sand.u32 %s37, 1
          %s104 = scalar_lea.sflag [#allocation3], %s103
          %s105 = sand.u32 %s37, 1
          %s106 = smul.addr %s105, 24
          %s107 = scalar_lea.vmem [#allocation2], %s106
          %s109 = ssub.s32 384, 384
          %110 = vsyncadd %s104, %s109
          %s111 = smul.addr %s20, 3
          %s112 = sadd.s32 %s21, %s111
          %s113 = smul.addr %s112, 128
          %s114 = scalar_lea.hbm %s0, %s113
          %s115 = sshll.u32 %s107, 4
          %s116 = int_to_ptr.vmem [resolvable:$true] %s115
          %121 = dma.hbm_to_vmem [thread:$0]  %s114, 384, %s116, %s104, 128, 128, 8
        $region20: #{tpu_custom_call.1} parent=15 // pred_fallthru
          _
      $region16: #{tpu_custom_call.1} parent=5 // pred_fallthru
        _
      %p122 = scmp.le.s32.totalorder 1, %s13
      %p123 = scmp.lt.s32.totalorder %s13, 3
      %p124 = pnand %p122, %p123
      %p125 = pneg %p124
      // Predicated region
      $region21: #{tpu_custom_call.1} parent=5 // pred_check
        _
      $region22: #{tpu_custom_call.1} parent=5 // pred_check_branch
        %127 = sbr.rel (%p124) target = $region24
      $region23: #{tpu_custom_call.1} parent=5 // pred_region
        %s128 = ssub.s32 %s13, 1
        %s129 = sand.u32 %s40, 1
        %s130 = scalar_lea.sflag [#allocation3], %s129
        %s131 = sand.u32 %s40, 1
        %s132 = smul.addr %s131, 24
        %s133 = scalar_lea.vmem [#allocation2], %s132
        // Predicated region
        $region25: #{tpu_custom_call.1} parent=23 // pred_check
          %p134 = pneg %p53
        $region26: #{tpu_custom_call.1} parent=23 // pred_check_branch
          %136 = sbr.rel (%p134) target = $region28
        $region27: #{tpu_custom_call.1} parent=23 // pred_region
          %137 = dma.done %s130, 384
        $region28: #{tpu_custom_call.1} parent=23 // pred_fallthru
          _
        %s138 = sand.u32 %s40, 1
        %s139 = scalar_lea.sflag [#allocation3], %s138
        %s140 = sand.u32 %s40, 1
        %s141 = smul.addr %s140, 24
        %s142 = scalar_lea.vmem [#allocation2], %s141
        %p143 = pneg %p53
        %p144 = pneg %p50
        %p145 = pneg %p81
        %p146 = pneg %p78
        %s147 = sand.u32 %s68, 1
        %s148 = scalar_lea.sflag [#allocation4], %s147
        %s149 = sand.u32 %s68, 1
        %s150 = smul.addr %s149, 8
        %s151 = scalar_lea.vmem [#allocation5], %s150
        %v152 = vld [vmem:[%s133] sm:$0xff]
        %s153 = scalar_lea.vmem %s133, 8 [#allocation2]
        %v154 = vld [vmem:[%s153] sm:$0xff]
        %s155 = scalar_lea.vmem %s133, 16 [#allocation2]
        %v156 = vld [vmem:[%s155] sm:$0xff]
        %v157 = vmul.f32 %v152, 0.2989
        %v158 = vmul.f32 %v154, 0.587
        %v159 = vadd.f32 %v157, %v158
        %v160 = vmul.f32 %v156, 0.114
        %v161 = vadd.f32 %v159, %v160
        %162 = vst [vmem:[%s151] sm:$0xff] %v161
        %s163 = sand.u32 %s68, 1
        %s164 = scalar_lea.sflag [#allocation4], %s163
        %s165 = sand.u32 %s68, 1
        %s166 = smul.addr %s165, 8
        %s167 = scalar_lea.vmem [#allocation5], %s166
        // Predicated region
        $region29: #{tpu_custom_call.1} parent=23 // pred_check
          %p168 = pneg %p78
        $region30: #{tpu_custom_call.1} parent=23 // pred_check_branch
          %170 = sbr.rel (%p168) target = $region32
        $region31: #{tpu_custom_call.1} parent=23 // pred_region
          %s172 = ssub.s32 128, 128
          %173 = vsyncadd %s164, %s172
          %s174 = sadd.s32 %s23, %s22
          %s175 = smul.addr %s174, 128
          %s176 = scalar_lea.hbm %s1, %s175
          %s178 = sshll.u32 %s167, 4
          %s179 = int_to_ptr.vmem [resolvable:$true] %s178
          %181 = dma.vmem_to_hbm [thread:$0]  %s179, 128, %s176, %s164
        $region32: #{tpu_custom_call.1} parent=23 // pred_fallthru
          _
      $region24: #{tpu_custom_call.1} parent=5 // pred_fallthru
        _
      %p182 = scmp.le.s32.totalorder 2, %s13
      // Predicated region
      $region33: #{tpu_custom_call.1} parent=5 // pred_check
        %p183 = pneg %p182
      $region34: #{tpu_custom_call.1} parent=5 // pred_check_branch
        %185 = sbr.rel (%p183) target = $region36
      $region35: #{tpu_custom_call.1} parent=5 // pred_region
        %s186 = ssub.s32 %s13, 2
        // Predicated region
        $region37: #{tpu_custom_call.1} parent=35 // pred_check
          %p187 = pneg %p84
        $region38: #{tpu_custom_call.1} parent=35 // pred_check_branch
          %189 = sbr.rel (%p187) target = $region40
        $region39: #{tpu_custom_call.1} parent=35 // pred_region
          %s190 = sand.u32 %s69, 1
          %s191 = scalar_lea.sflag [#allocation4], %s190
          %s192 = sand.u32 %s69, 1
          %s193 = smul.addr %s192, 8
          %s194 = scalar_lea.vmem [#allocation5], %s193
          %195 = dma.done %s191, 128
        $region40: #{tpu_custom_call.1} parent=35 // pred_fallthru
          _
      $region36: #{tpu_custom_call.1} parent=5 // pred_fallthru
        _
    $region6: #{tpu_custom_call.1} parent=1 // loop_footer
      %s17 = sadd.s32 1, %s13
    $region7: #{tpu_custom_call.1} parent=1 // loop_footer_branch
      %12 = sbr.rel target = $region3
    $region8: #{tpu_custom_call.1} parent=1 // loop_exit
      _
    %196 = vsyncpa [#allocation3], 1
    %s197 = scalar_lea.sflag [#allocation3], 1
    %198 = vsyncpa %s197, 1
    %199 = vsyncpa [#allocation4], 1
    %s200 = scalar_lea.sflag [#allocation4], 1
    %201 = vsyncpa %s200, 1

</llo_original>
